<compile_context>
chip_gen: v5e
topology: v5e:2x2
jax: 0.10.0
libtpu: 0.0.40
codegen_flags: <defaults>
</compile_context>

<pallas_src>
import jax
import jax.numpy as jnp
from jax import lax
from jax.experimental import pallas as pl
from jax.experimental.pallas import tpu as pltpu


def _make_vq_decode_kernel(exact_tiebreak):
    def kernel(lat_ref, vec_ref, cbm2e2_ref, cbdec_ref, out_ref):
        # lat_ref, vec_ref : (1, C+1, THW) pixel tile, channels on sublanes.
        #                    Row C of lat is 1.0 (vec: 0.0), so z = lat+vec has a
        #                    constant-1 row that multiplies the ||e||^2 column of
        #                    cbm2e2 -> bias folded into the matmul, no VPU add.
        # cbm2e2_ref       : (Kp, C+1)  [-2*codebook | ||e||^2]; pad rows have a
        #                    zero codebook part and ||e||^2 = 1e30 (never win).
        # cbdec_ref        : (Cop, Kp)  (codebook @ w_dec + b_dec)^T, Cout padded
        #                    to Cop sublanes, pad codebook columns are 0.
        # out_ref          : (1, Cop, THW)
        z = lat_ref[0] + vec_ref[0]                                   # (C+1, THW)

        # d[k, p] = -2 e_k . z_p + ||e_k||^2   (per-pixel ||z||^2 dropped:
        # argmin-invariant). One MXU op, f32 accumulate.
        d = jnp.dot(cbm2e2_ref[...], z,
                    preferred_element_type=jnp.float32)               # (Kp, THW)

        dmin = jnp.min(d, axis=0, keepdims=True)                      # (1, THW)
        if exact_tiebreak:
            # First-hit tie-break (bit-matches torch.argmin on exact f32 ties).
            kp = d.shape[0]
            iota_k = lax.broadcasted_iota(jnp.int32, d.shape, 0)
            idx = jnp.min(jnp.where(d == dmin, iota_k, kp), axis=0, keepdims=True)
            onehot = (iota_k == idx).astype(jnp.float32)              # (Kp, THW)
        else:
            # Fast path: an exact f32 tie (measure-zero for real data) would sum
            # two codebook rows; saves ~3 full (Kp, THW) VPU passes per step.
            onehot = (d == dmin).astype(jnp.float32)                  # (Kp, THW)

        # Fused gather + 1x1-conv decode: dec[c, p] = cb_dec[argmin_k d[k,p], c].
        dec = jnp.dot(cbdec_ref[...], onehot,
                      preferred_element_type=jnp.float32)             # (Cop, THW)
        out_ref[0] = dec.astype(out_ref.dtype)

    return kernel


def precompute_codebook_tables(codebook, w_dec, b_dec, *, use_bf16_matmul=True,
                               cout_pad=8):
    """Padded / fused codebook tables.

    In the real optimize() loop the codebook and decoder are fixed; build these
    once and pass tables=... to image_prompt_forward so they are not rebuilt
    (and re-written to HBM) on every optimizer step.
    """
    K, C = codebook.shape
    Cout = w_dec.shape[1]
    Kp = ((K + 127) // 128) * 128                       # full MXU / vreg tile
    e2 = jnp.sum(codebook * codebook, axis=1)
    cbm2e2 = jnp.zeros((Kp, C + 1), jnp.float32)
    cbm2e2 = cbm2e2.at[:, C].set(1e30)                  # pad rows never win argmin
    cbm2e2 = cbm2e2.at[:K, :C].set(-2.0 * codebook)     # exact: power-of-two scale
    cbm2e2 = cbm2e2.at[:K, C].set(e2)
    Cop = max(cout_pad, Cout)                           # full-sublane output tile
    cbdec = jnp.zeros((Cop, Kp), jnp.float32).at[:Cout, :K].set(
        (codebook @ w_dec + b_dec[None, :]).T)
    if use_bf16_matmul:
        cbm2e2 = cbm2e2.astype(jnp.bfloat16)
    return cbm2e2, cbdec


def _choose_tile(HW, tile_cap, batch):
    """Pick a lane-dense pixel tile (multiple of 128) and the padded HW."""
    cap = max(128, (int(tile_cap) // 128) * 128)
    hw128 = ((HW + 127) // 128) * 128
    if hw128 <= cap:
        thw, hw_pad = hw128, hw128                      # one lane-dense tile
    else:
        best = 0
        t = 128
        while t <= cap:                                 # largest 128-mult divisor
            if HW % t == 0:
                best = t
            t += 128
        if best >= 1024:
            thw, hw_pad = best, HW                      # exact split, no padding
        else:
            thw = cap                                   # masked-tail padding
            hw_pad = ((HW + thw - 1) // thw) * thw
    # v7x has 2 TensorCores: keep enough grid programs to feed both.
    while (thw >= 2048 and thw % 256 == 0 and hw_pad % (thw // 2) == 0
           and batch * (hw_pad // thw) < 8):
        thw //= 2
    return thw, hw_pad


def image_prompt_forward(latent_nchw, vector_nchw, codebook, w_dec, b_dec, *,
                         tile_hw=4096, use_bf16_matmul=True,
                         exact_tiebreak=False, tables=None):
    """Forward pass of ImagePromptOptimizer with the synthetic VQGAN.

    use_bf16_matmul: run the dominant latent/vector streams and the distance
    matmul in bf16 (f32 MXU accumulate). Halves HBM bytes of the two big
    streams; nearest-neighbour indices can differ from the pure-f32 path only
    on near-ties.
    """
    B, C, H, W = latent_nchw.shape
    K, Ce = codebook.shape
    assert Ce == C
    Cout = w_dec.shape[1]
    HW = H * W

    if tables is None:
        tables = precompute_codebook_tables(codebook, w_dec, b_dec,
                                            use_bf16_matmul=use_bf16_matmul)
    cbm2e2, cbdec = tables
    Kp, Caug = cbm2e2.shape
    Cop = cbdec.shape[0]
    assert Caug == C + 1 and Cop >= Cout

    in_dtype = jnp.bfloat16 if use_bf16_matmul else jnp.float32
    thw, hw_pad = _choose_tile(HW, tile_hw, B)

    # No layout transposes: NCHW already gives channels-on-sublane (B, C, HW).
    lat3 = latent_nchw.reshape(B, C, HW).astype(in_dtype)
    vec3 = vector_nchw.reshape(B, C, HW).astype(in_dtype)
    if hw_pad != HW:
        pad = hw_pad - HW
        lat3 = jnp.pad(lat3, ((0, 0), (0, 0), (0, pad)))
        vec3 = jnp.pad(vec3, ((0, 0), (0, 0), (0, pad)))
    # Fold the ||e||^2 bias into the distance matmul: constant ones row on the
    # latent (zeros on the vector) pairs with the e2 column of cbm2e2.
    lat3 = jnp.concatenate([lat3, jnp.ones((B, 1, hw_pad), in_dtype)], axis=1)
    vec3 = jnp.concatenate([vec3, jnp.zeros((B, 1, hw_pad), in_dtype)], axis=1)

    n_t = hw_pad // thw
    flops = B * hw_pad * (2 * Kp * Caug + 2 * Cop * Kp)
    bytes_accessed = (2 * B * Caug * hw_pad * lat3.dtype.itemsize
                      + B * Cop * hw_pad * 4
                      + cbm2e2.size * cbm2e2.dtype.itemsize + cbdec.size * 4)

    out3 = pl.pallas_call(
        _make_vq_decode_kernel(exact_tiebreak),
        out_shape=jax.ShapeDtypeStruct((B, Cop, hw_pad), jnp.float32),
        grid_spec=pltpu.PrefetchScalarGridSpec(
            num_scalar_prefetch=0,
            grid=(B, n_t),
            in_specs=[
                pl.BlockSpec((1, Caug, thw), lambda b, t: (b, 0, t)),  # latent tile
                pl.BlockSpec((1, Caug, thw), lambda b, t: (b, 0, t)),  # vector tile
                # Constant operands (~20 KB total): double-buffering them costs
                # negligible VMEM, so the default pipelining is left alone.
                pl.BlockSpec((Kp, Caug), lambda b, t: (0, 0)),         # [-2*cb | e2]
                pl.BlockSpec((Cop, Kp), lambda b, t: (0, 0)),          # decoded cb^T
            ],
            out_specs=pl.BlockSpec((1, Cop, thw), lambda b, t: (b, 0, t)),
        ),
        compiler_params=pltpu.CompilerParams(
            dimension_semantics=("parallel", "parallel"),
            # thw<=4096 keeps live VMEM well under this even with double buffers;
            # 48 MiB also fits inside v7x's 64 MiB physical VMEM.
            vmem_limit_bytes=48 * 1024 * 1024,
        ),
        cost_estimate=pl.CostEstimate(flops=flops, transcendentals=0,
                                      bytes_accessed=bytes_accessed),
    )(lat3, vec3, cbm2e2, cbdec)

    # (B, Cop, hw_pad) -> NCHW image: slice off channel/pixel padding, reshape only.
    return out3[:, :Cout, :HW].reshape(B, Cout, H, W)


def _reference_forward(latent_nchw, vector_nchw, codebook, w_dec, b_dec, *,
                       bf16_distance=False):
    """Pure-JAX reference for correctness checking (module semantics)."""
    B, C, H, W = latent_nchw.shape
    if bf16_distance:
        # Mirror the kernel's bf16 quantization of the distance computation so
        # the nearest-neighbour indices match the fast path.
        zq = (latent_nchw.astype(jnp.bfloat16) + vector_nchw.astype(jnp.bfloat16))
        zq = zq.transpose(0, 2, 3, 1).reshape(-1, C)
        cbq = (-2.0 * codebook).astype(jnp.bfloat16)
        e2q = jnp.sum(codebook * codebook, axis=1).astype(jnp.bfloat16)
        d = (jnp.dot(zq, cbq.T, preferred_element_type=jnp.float32)
             + e2q.astype(jnp.float32)[None, :])
    else:
        z = (latent_nchw + vector_nchw).transpose(0, 2, 3, 1).reshape(-1, C)
        d = (jnp.sum(z * z, axis=1, keepdims=True)
             - 2.0 * z @ codebook.T
             + jnp.sum(codebook * codebook, axis=1)[None, :])
    idx = jnp.argmin(d, axis=1)
    z_q = codebook[idx]
    dec = z_q @ w_dec + b_dec[None, :]
    return dec.reshape(B, H, W, -1).transpose(0, 3, 1, 2)


if __name__ == "__main__":
    # Small shapes consistent with a VQGAN latent: B=2, embed C=32, 8x8 latent
    # grid, codebook of 64 entries, RGB (3-channel) decoded output.
    B, C, H, W = 2, 32, 8, 8
    K, COUT = 64, 3

    key = jax.random.PRNGKey(0)
    k_lat, k_vec, k_cb, k_w, k_b = jax.random.split(key, 5)

    latent = jax.random.normal(k_lat, (B, C, H, W), dtype=jnp.float32)
    vector = 0.1 * jax.random.normal(k_vec, (B, C, H, W), dtype=jnp.float32)
    codebook = jax.random.normal(k_cb, (K, C), dtype=jnp.float32)
    w_dec = jax.random.normal(k_w, (C, COUT), dtype=jnp.float32) / jnp.sqrt(C)
    b_dec = 0.01 * jax.random.normal(k_b, (COUT,), dtype=jnp.float32)

    # Exact f32 path: matches the f32 reference tightly.
    dec_f32 = image_prompt_forward(latent, vector, codebook, w_dec, b_dec,
                                   use_bf16_matmul=False)
    dec_f32 = jax.block_until_ready(dec_f32)
    ref_f32 = _reference_forward(latent, vector, codebook, w_dec, b_dec)
    assert dec_f32.shape == (B, COUT, H, W), dec_f32.shape
    assert jnp.allclose(dec_f32, ref_f32, atol=1e-4, rtol=1e-4), "f32 mismatch"

    # Default fast path (bf16 distance matmul, tables hoisted as in optimize()):
    # compare against a reference with the same bf16 rounding before the argmin.
    tables = precompute_codebook_tables(codebook, w_dec, b_dec,
                                        use_bf16_matmul=True)
    dec = image_prompt_forward(latent, vector, codebook, w_dec, b_dec,
                               tables=tables)
    dec = jax.block_until_ready(dec)
    ref_bf16 = _reference_forward(latent, vector, codebook, w_dec, b_dec,
                                  bf16_distance=True)
    assert dec.shape == (B, COUT, H, W), dec.shape
    assert jnp.allclose(dec, ref_bf16, atol=1e-3, rtol=1e-3), "bf16 mismatch"

    print("KERNEL_OK")
</pallas_src>

<mosaic_0001>
module attributes {stable_mosaic.version = 11 : i64} {
  func.func @kernel(%arg0: i32, %arg1: i32, %arg2: memref<1x33x128xf32, #tpu.memory_space<vmem>>, %arg3: memref<1x33x128xf32, #tpu.memory_space<vmem>>, %arg4: memref<128x33xf32, #tpu.memory_space<vmem>>, %arg5: memref<8x128xf32, #tpu.memory_space<vmem>>, %arg6: memref<1x8x128xf32, #tpu.memory_space<vmem>>) attributes {dimension_semantics = [#tpu.dimension_semantics<parallel>, #tpu.dimension_semantics<parallel>], iteration_bounds = array<i64: 2, 1>, scalar_prefetch = 0 : i64, scratch_operands = 0 : i64, tpu.core_type = #tpu.core_type<tc>, window_params = [{transform_indices = @transform_0, window_bounds = array<i64: 1, 33, 128>}, {transform_indices = @transform_1, window_bounds = array<i64: 1, 33, 128>}, {pipeline_mode = #tpu.pipeline_mode<synchronous>, transform_indices = @transform_2, window_bounds = array<i64: 128, 33>}, {pipeline_mode = #tpu.pipeline_mode<synchronous>, transform_indices = @transform_3, window_bounds = array<i64: 8, 128>}, {transform_indices = @transform_4, window_bounds = array<i64: 1, 8, 128>}]} {
    %c0 = arith.constant 0 : index
    %c0_0 = arith.constant 0 : index
    %c0_1 = arith.constant 0 : index
    %0 = vector.load %arg2[%c0, %c0_0, %c0_1] : memref<1x33x128xf32, #tpu.memory_space<vmem>>, vector<1x33x128xf32>
    %1 = vector.shape_cast %0 : vector<1x33x128xf32> to vector<33x128xf32>
    %c0_2 = arith.constant 0 : index
    %c0_3 = arith.constant 0 : index
    %c0_4 = arith.constant 0 : index
    %2 = vector.load %arg3[%c0_2, %c0_3, %c0_4] : memref<1x33x128xf32, #tpu.memory_space<vmem>>, vector<1x33x128xf32>
    %3 = vector.shape_cast %2 : vector<1x33x128xf32> to vector<33x128xf32>
    %4 = arith.addf %1, %3 : vector<33x128xf32>
    %c0_5 = arith.constant 0 : index
    %c0_6 = arith.constant 0 : index
    %5 = vector.load %arg4[%c0_5, %c0_6] : memref<128x33xf32, #tpu.memory_space<vmem>>, vector<128x33xf32>
    %cst = arith.constant dense<0.000000e+00> : vector<128x128xf32>
    %6 = tpu.matmul %5, %4, %cst {dimension_numbers = #tpu.dot_dimension_numbers<[1], [0], [0], [1], [0, 0, 1, 1], [], []>} : vector<128x33xf32>, vector<33x128xf32>, vector<128x128xf32> -> vector<128x128xf32>
    %cst_7 = arith.constant dense<0x7F800000> : vector<128xf32>
    %7 = vector.multi_reduction <minimumf>, %6, %cst_7 [0] : vector<128x128xf32> to vector<128xf32>
    %8 = vector.shape_cast %7 : vector<128xf32> to vector<1x128xf32>
    %9 = vector.broadcast %8 : vector<1x128xf32> to vector<128x128xf32>
    %10 = arith.cmpf oeq, %6, %9 : vector<128x128xf32>
    %11 = arith.extui %10 : vector<128x128xi1> to vector<128x128xi32>
    %12 = arith.sitofp %11 : vector<128x128xi32> to vector<128x128xf32>
    %c0_8 = arith.constant 0 : index
    %c0_9 = arith.constant 0 : index
    %13 = vector.load %arg5[%c0_8, %c0_9] : memref<8x128xf32, #tpu.memory_space<vmem>>, vector<8x128xf32>
    %cst_10 = arith.constant dense<0.000000e+00> : vector<8x128xf32>
    %14 = tpu.matmul %13, %12, %cst_10 {dimension_numbers = #tpu.dot_dimension_numbers<[1], [0], [0], [1], [0, 0, 1, 1], [], []>} : vector<8x128xf32>, vector<128x128xf32>, vector<8x128xf32> -> vector<8x128xf32>
    %c0_11 = arith.constant 0 : index
    %c0_12 = arith.constant 0 : index
    %c0_13 = arith.constant 0 : index
    %15 = vector.load %arg6[%c0_11, %c0_12, %c0_13] : memref<1x8x128xf32, #tpu.memory_space<vmem>>, vector<1x8x128xf32>
    %16 = vector.shape_cast %15 : vector<1x8x128xf32> to vector<8x128xf32>
    %17 = vector.shape_cast %14 : vector<8x128xf32> to vector<1x8x128xf32>
    tpu.vector_store %arg6[%c0_11, %c0_12, %c0_13], %17 {strides = array<i32>} : memref<1x8x128xf32, #tpu.memory_space<vmem>>, vector<1x8x128xf32>,
    return
  }
  func.func @transform_0(%arg0: i32, %arg1: i32) -> (i32, i32, i32) {
    %c0_i32 = arith.constant 0 : i32
    %c0_i32_0 = arith.constant 0 : i32
    return %arg0, %c0_i32, %arg1 : i32, i32, i32
  }
  func.func @transform_1(%arg0: i32, %arg1: i32) -> (i32, i32, i32) {
    %c0_i32 = arith.constant 0 : i32
    %c0_i32_0 = arith.constant 0 : i32
    return %arg0, %c0_i32, %arg1 : i32, i32, i32
  }
  func.func @transform_2(%arg0: i32, %arg1: i32) -> (i32, i32) {
    %c0_i32 = arith.constant 0 : i32
    %c0_i32_0 = arith.constant 0 : i32
    %c0_i32_1 = arith.constant 0 : i32
    return %c0_i32, %c0_i32_0 : i32, i32
  }
  func.func @transform_3(%arg0: i32, %arg1: i32) -> (i32, i32) {
    %c0_i32 = arith.constant 0 : i32
    %c0_i32_0 = arith.constant 0 : i32
    %c0_i32_1 = arith.constant 0 : i32
    return %c0_i32, %c0_i32_0 : i32, i32
  }
  func.func @transform_4(%arg0: i32, %arg1: i32) -> (i32, i32, i32) {
    %c0_i32 = arith.constant 0 : i32
    %c0_i32_0 = arith.constant 0 : i32
    return %arg0, %c0_i32, %arg1 : i32, i32, i32
  }
}

</mosaic_0001>

<llo_original>
// kernel: tpu_custom_call.1
$region0: #{tpu_custom_call.1}
  #allocation0 [shape = 'u32[]', space=smem, size = 0x4, offset = 0x4, fixed_abs, tag = 'smem constant byte address 0x4 - core index']
  #allocation1 [shape = 'u32[72,128]{1,0:T(1,128)}', space=vmem, size = 0x9000, scoped, tag = 'internal scratch']
  %s0 = inlined_call_operand.vmem [shape: f32[2,33,128], index: 0, kind: input, shape index: {}]
  %s1 = inlined_call_operand.vmem [shape: f32[2,33,128], index: 1, kind: input, shape index: {}]
  %s2 = inlined_call_operand.vmem [shape: f32[128,33], index: 2, kind: input, shape index: {}]
  %s3 = inlined_call_operand.vmem [shape: f32[8,128], index: 3, kind: input, shape index: {}]
  %s4 = inlined_call_operand.hbm [shape: f32[2,8,128], index: 4, kind: output, shape index: {}]
  %s5 = sld [smem:[#allocation0]]
  $region49: #{tpu_custom_call.1} parent=0
    _
  %s7 = ssub.s32 1, %s5
  %s8 = scalar_select 0, %s7, %s5
  $region1: #{tpu_custom_call.1} parent=0
    #allocation2 [shape = 'u8[8192]{0}', space=vmem, size = 0x2000, scoped, tag = 'output window, operand 0']
    #allocation3 [shape = 's32[2]{0}', space=sflag, size = 0x8, scoped, tag = 'scoped memory for tpu_custom_call.1']
    %9 = vsyncpa [#allocation3], 0
    %s10 = scalar_lea.sflag [#allocation3], 1
    %11 = vsyncpa %s10, 0
    loop: start=0, step=1, limit=4
    $region2: #{tpu_custom_call.1} parent=1 // loop_pre_header
      _
    $region3: #{tpu_custom_call.1} parent=1 // loop_header
      %s13 = sphi 0, %s17
      %p14 = scmp.ge.s32.totalorder %s13, 4
      %s20 = sphi 0, %s32
      %s21 = sphi 0, %s28
      %s22 = sphi 0, %s20
      %s23 = sphi 0, %s21
      %s24 = sphi 0, %s22
      %s25 = sphi 0, %s23
      %s37 = sphi 0, %s39
      %s40 = sphi 0, %s37
      %s41 = sphi 0, %s40
      %s57 = sphi 0, %s41
      %s65 = sphi 0, %s67
      %s68 = sphi 0, %s65
      %s69 = sphi 0, %s68
      %s85 = sphi 0, %s69
      %s89 = sphi 0, %s89
      %s91 = sphi 0, %s89
      %s92 = sphi 0, %s91
      %s106 = sphi 0, %s92
      %s110 = sphi 0, %s110
      %s112 = sphi 0, %s110
      %s113 = sphi 0, %s112
      %s127 = sphi 0, %s113
      %s135 = sphi 0, %s137
      %s138 = sphi 0, %s135
      %s139 = sphi 0, %s138
      %s155 = sphi 0, %s139
    $region4: #{tpu_custom_call.1} parent=1 // loop_header_branch
      %16 = sbr.rel (%p14) target = $region8
    $region5: #{tpu_custom_call.1} parent=1 // loop_body
      %s18 = ssub.s32 %s13, 1
      %s19 = ssub.s32 %s13, 2
      %s26 = sadd.s32 1, %s21
      %p27 = scmp.ge.s32.totalorder %s26, 1
      %s28 = scalar_select %p27, 0, %s26
      %s29 = sadd.s32 1, %s20
      %s30 = scalar_select %p27, %s29, %s20
      %p31 = scmp.ge.s32.totalorder %s30, 2
      %s32 = scalar_select %p31, 0, %s30
      %s33 = ssub.s32 %s20, %s32
      %s34 = ssub.s32 %s21, %s28
      %s35 = sor.u32 %s33, %s34
      %p36 = scmp.eq.s32.totalorder %s35, 0
      %s38 = sadd.s32 %s37, 1
      %s39 = scalar_select %p36, %s37, %s38
      %p42 = pneg %p36
      %p43 = scmp.eq.s32.totalorder %s13, 1
      %p44 = por %p42, %p43
      %p45 = scmp.ne.s32.totalorder %s37, %s40
      %p46 = scmp.eq.s32.totalorder %s13, 0
      %p47 = por %p45, %p46
      %p48 = scmp.ne.s32.totalorder %s37, %s40
      %p49 = scmp.eq.s32.totalorder %s18, 1
      %p50 = por %p48, %p49
      %p51 = scmp.ne.s32.totalorder %s40, %s41
      %p52 = scmp.eq.s32.totalorder %s18, 0
      %p53 = por %p51, %p52
      %p54 = scmp.ne.s32.totalorder %s40, %s41
      %p55 = scmp.eq.s32.totalorder %s19, 1
      %p56 = por %p54, %p55
      %p58 = scmp.ne.s32.totalorder %s41, %s57
      %p59 = scmp.eq.s32.totalorder %s19, 0
      %p60 = por %p58, %p59
      %s61 = ssub.s32 %s20, %s32
      %s62 = ssub.s32 %s21, %s28
      %s63 = sor.u32 %s61, %s62
      %p64 = scmp.eq.s32.totalorder %s63, 0
      %s66 = sadd.s32 %s65, 1
      %s67 = scalar_select %p64, %s65, %s66
      %p70 = pneg %p64
      %p71 = scmp.eq.s32.totalorder %s13, 1
      %p72 = por %p70, %p71
      %p73 = scmp.ne.s32.totalorder %s65, %s68
      %p74 = scmp.eq.s32.totalorder %s13, 0
      %p75 = por %p73, %p74
      %p76 = scmp.ne.s32.totalorder %s65, %s68
      %p77 = scmp.eq.s32.totalorder %s18, 1
      %p78 = por %p76, %p77
      %p79 = scmp.ne.s32.totalorder %s68, %s69
      %p80 = scmp.eq.s32.totalorder %s18, 0
      %p81 = por %p79, %p80
      %p82 = scmp.ne.s32.totalorder %s68, %s69
      %p83 = scmp.eq.s32.totalorder %s19, 1
      %p84 = por %p82, %p83
      %p86 = scmp.ne.s32.totalorder %s69, %s85
      %p87 = scmp.eq.s32.totalorder %s19, 0
      %p88 = por %p86, %p87
      %s90 = sadd.s32 %s89, 1
      %p93 = scmp.eq.s32.totalorder %s13, 1
      %p94 = scmp.ne.s32.totalorder %s89, %s91
      %p95 = scmp.eq.s32.totalorder %s13, 0
      %p96 = por %p94, %p95
      %p97 = scmp.ne.s32.totalorder %s89, %s91
      %p98 = scmp.eq.s32.totalorder %s18, 1
      %p99 = por %p97, %p98
      %p100 = scmp.ne.s32.totalorder %s91, %s92
      %p101 = scmp.eq.s32.totalorder %s18, 0
      %p102 = por %p100, %p101
      %p103 = scmp.ne.s32.totalorder %s91, %s92
      %p104 = scmp.eq.s32.totalorder %s19, 1
      %p105 = por %p103, %p104
      %p107 = scmp.ne.s32.totalorder %s92, %s106
      %p108 = scmp.eq.s32.totalorder %s19, 0
      %p109 = por %p107, %p108
      %s111 = sadd.s32 %s110, 1
      %p114 = scmp.eq.s32.totalorder %s13, 1
      %p115 = scmp.ne.s32.totalorder %s110, %s112
      %p116 = scmp.eq.s32.totalorder %s13, 0
      %p117 = por %p115, %p116
      %p118 = scmp.ne.s32.totalorder %s110, %s112
      %p119 = scmp.eq.s32.totalorder %s18, 1
      %p120 = por %p118, %p119
      %p121 = scmp.ne.s32.totalorder %s112, %s113
      %p122 = scmp.eq.s32.totalorder %s18, 0
      %p123 = por %p121, %p122
      %p124 = scmp.ne.s32.totalorder %s112, %s113
      %p125 = scmp.eq.s32.totalorder %s19, 1
      %p126 = por %p124, %p125
      %p128 = scmp.ne.s32.totalorder %s113, %s127
      %p129 = scmp.eq.s32.totalorder %s19, 0
      %p130 = por %p128, %p129
      %s131 = ssub.s32 %s20, %s32
      %s132 = ssub.s32 %s21, %s28
      %s133 = sor.u32 %s131, %s132
      %p134 = scmp.eq.s32.totalorder %s133, 0
      %s136 = sadd.s32 %s135, 1
      %s137 = scalar_select %p134, %s135, %s136
      %p140 = pneg %p134
      %p141 = scmp.eq.s32.totalorder %s13, 1
      %p142 = por %p140, %p141
      %p143 = scmp.ne.s32.totalorder %s135, %s138
      %p144 = scmp.eq.s32.totalorder %s13, 0
      %p145 = por %p143, %p144
      %p146 = scmp.ne.s32.totalorder %s135, %s138
      %p147 = scmp.eq.s32.totalorder %s18, 1
      %p148 = por %p146, %p147
      %p149 = scmp.ne.s32.totalorder %s138, %s139
      %p150 = scmp.eq.s32.totalorder %s18, 0
      %p151 = por %p149, %p150
      %p152 = scmp.ne.s32.totalorder %s138, %s139
      %p153 = scmp.eq.s32.totalorder %s19, 1
      %p154 = por %p152, %p153
      %p156 = scmp.ne.s32.totalorder %s139, %s155
      %p157 = scmp.eq.s32.totalorder %s19, 0
      %p158 = por %p156, %p157
      %p159 = scmp.le.s32.totalorder 1, %s13
      %p160 = scmp.lt.s32.totalorder %s13, 3
      %p161 = pnand %p159, %p160
      %p162 = pneg %p161
      // Predicated region
      $region9: #{tpu_custom_call.1} parent=5 // pred_check
        _
      $region10: #{tpu_custom_call.1} parent=5 // pred_check_branch
        %164 = sbr.rel (%p161) target = $region12
      $region11: #{tpu_custom_call.1} parent=5 // pred_region
        %s165 = ssub.s32 %s13, 1
        // Predicated region
        $region13: #{tpu_custom_call.1} parent=11 // pred_check
          %p166 = pneg %p102
        $region14: #{tpu_custom_call.1} parent=11 // pred_check_branch
          %168 = sbr.rel (%p166) target = $region16
        $region15: #{tpu_custom_call.1} parent=11 // pred_region
          _
        $region16: #{tpu_custom_call.1} parent=11 // pred_fallthru
          _
        // Predicated region
        $region17: #{tpu_custom_call.1} parent=11 // pred_check
          %p169 = pneg %p123
        $region18: #{tpu_custom_call.1} parent=11 // pred_check_branch
          %171 = sbr.rel (%p169) target = $region20
        $region19: #{tpu_custom_call.1} parent=11 // pred_region
          _
        $region20: #{tpu_custom_call.1} parent=11 // pred_fallthru
          _
      $region12: #{tpu_custom_call.1} parent=5 // pred_fallthru
        _
      %p172 = scmp.lt.s32.totalorder %s13, 2
      // Predicated region
      $region21: #{tpu_custom_call.1} parent=5 // pred_check
        %p173 = pneg %p172
      $region22: #{tpu_custom_call.1} parent=5 // pred_check_branch
        %175 = sbr.rel (%p173) target = $region24
      $region23: #{tpu_custom_call.1} parent=5 // pred_region
        // Predicated region
        $region25: #{tpu_custom_call.1} parent=23 // pred_check
          %p176 = pneg %p47
        $region26: #{tpu_custom_call.1} parent=23 // pred_check_branch
          %178 = sbr.rel (%p176) target = $region28
        $region27: #{tpu_custom_call.1} parent=23 // pred_region
          %p179 = scmp.lt.s32.totalorder %s20, 1
          %s180 = scalar_select %p179, %s20, 1
          %p181 = scmp.lt.s32.totalorder %s21, 0
          %s182 = scalar_select %p181, %s21, 0
          %s183 = smul.addr %s180, 5
          %s184 = sadd.s32 %s182, %s183
          %s185 = smul.addr %s184, 8
          %s186 = scalar_lea.vmem %s0, %s185
        $region28: #{tpu_custom_call.1} parent=23 // pred_fallthru
          _
        // Predicated region
        $region29: #{tpu_custom_call.1} parent=23 // pred_check
          %p187 = pneg %p75
        $region30: #{tpu_custom_call.1} parent=23 // pred_check_branch
          %189 = sbr.rel (%p187) target = $region32
        $region31: #{tpu_custom_call.1} parent=23 // pred_region
          %p190 = scmp.lt.s32.totalorder %s20, 1
          %s191 = scalar_select %p190, %s20, 1
          %p192 = scmp.lt.s32.totalorder %s21, 0
          %s193 = scalar_select %p192, %s21, 0
          %s194 = smul.addr %s191, 5
          %s195 = sadd.s32 %s193, %s194
          %s196 = smul.addr %s195, 8
          %s197 = scalar_lea.vmem %s1, %s196
        $region32: #{tpu_custom_call.1} parent=23 // pred_fallthru
          _
      $region24: #{tpu_custom_call.1} parent=5 // pred_fallthru
        _
      %p198 = scmp.le.s32.totalorder 1, %s13
      %p199 = scmp.lt.s32.totalorder %s13, 3
      %p200 = pnand %p198, %p199
      %p201 = pneg %p200
      // Predicated region
      $region33: #{tpu_custom_call.1} parent=5 // pred_check
        _
      $region34: #{tpu_custom_call.1} parent=5 // pred_check_branch
        %203 = sbr.rel (%p200) target = $region36
      $region35: #{tpu_custom_call.1} parent=5 // pred_region
        %s204 = ssub.s32 %s13, 1
        %p205 = scmp.lt.s32.totalorder %s22, 1
        %s206 = scalar_select %p205, %s22, 1
        %p207 = scmp.lt.s32.totalorder %s23, 0
        %s208 = scalar_select %p207, %s23, 0
        %s209 = smul.addr %s206, 5
        %s210 = sadd.s32 %s208, %s209
        %s211 = smul.addr %s210, 8
        %s212 = scalar_lea.vmem %s0, %s211
        %p213 = pneg %p53
        %p214 = pneg %p50
        %p215 = scmp.lt.s32.totalorder %s22, 1
        %s216 = scalar_select %p215, %s22, 1
        %p217 = scmp.lt.s32.totalorder %s23, 0
        %s218 = scalar_select %p217, %s23, 0
        %s219 = smul.addr %s216, 5
        %s220 = sadd.s32 %s218, %s219
        %s221 = smul.addr %s220, 8
        %s222 = scalar_lea.vmem %s1, %s221
        %p223 = pneg %p81
        %p224 = pneg %p78
        %p225 = pneg %p102
        %p226 = pneg %p99
        %p227 = pneg %p123
        %p228 = pneg %p120
        %p229 = pneg %p151
        %p230 = pneg %p148
        %s231 = sand.u32 %s138, 1
        %s232 = scalar_lea.sflag [#allocation3], %s231
        %s233 = sand.u32 %s138, 1
        %s234 = smul.addr %s233, 8
        %s235 = scalar_lea.vmem [#allocation2], %s234
        %p236 = scmp.lt.s32.totalorder %s22, 1
        %s237 = scalar_select %p236, %s22, 1
        %p238 = scmp.lt.s32.totalorder %s23, 0
        %s239 = scalar_select %p238, %s23, 0
        %s240 = smul.addr %s237, 5
        %s241 = sadd.s32 %s239, %s240
        %s242 = smul.addr %s241, 8
        %s243 = scalar_lea.vmem %s0, %s242
        %p244 = scmp.lt.s32.totalorder %s22, 1
        %s245 = scalar_select %p244, %s22, 1
        %p246 = scmp.lt.s32.totalorder %s23, 0
        %s247 = scalar_select %p246, %s23, 0
        %s248 = smul.addr %s245, 5
        %s249 = sadd.s32 %s247, %s248
        %s250 = smul.addr %s249, 8
        %s251 = scalar_lea.vmem %s1, %s250
        %v252 = vld [vmem:[%s243] sm:$0xff]
        %v253 = vld [vmem:[%s243 + $0x8] sm:$0xff]
        %v254 = vld [vmem:[%s243 + $0x10] sm:$0xff]
        %v255 = vld [vmem:[%s243 + $0x18] sm:$0xff]
        %v256 = vld [vmem:[%s243 + $0x20] sm:$0x1]
        %v257 = vld [vmem:[%s251] sm:$0xff]
        %v258 = vld [vmem:[%s251 + $0x8] sm:$0xff]
        %v259 = vld [vmem:[%s251 + $0x10] sm:$0xff]
        %v260 = vld [vmem:[%s251 + $0x18] sm:$0xff]
        %v261 = vld [vmem:[%s251 + $0x20] sm:$0x1]
        %v262 = vadd.f32 %v252, %v257
        %v263 = vadd.f32 %v253, %v258
        %v264 = vadd.f32 %v254, %v259
        %v265 = vadd.f32 %v255, %v260
        %v266 = vadd.f32 %v256, %v261
        %v267 = vld [vmem:[%s2] sm:$0xff]
        %v268 = vld [vmem:[%s2 + $0x8] sm:$0xff]
        %v269 = vld [vmem:[%s2 + $0x10] sm:$0xff]
        %v270 = vld [vmem:[%s2 + $0x18] sm:$0xff]
        %v271 = vld [vmem:[%s2 + $0x20] sm:$0xff]
        %v272 = vld [vmem:[%s2 + $0x28] sm:$0xff]
        %v273 = vld [vmem:[%s2 + $0x30] sm:$0xff]
        %v274 = vld [vmem:[%s2 + $0x38] sm:$0xff]
        %v275 = vld [vmem:[%s2 + $0x40] sm:$0xff]
        %v276 = vld [vmem:[%s2 + $0x48] sm:$0xff]
        %v277 = vld [vmem:[%s2 + $0x50] sm:$0xff]
        %v278 = vld [vmem:[%s2 + $0x58] sm:$0xff]
        %v279 = vld [vmem:[%s2 + $0x60] sm:$0xff]
        %v280 = vld [vmem:[%s2 + $0x68] sm:$0xff]
        %v281 = vld [vmem:[%s2 + $0x70] sm:$0xff]
        %v282 = vld [vmem:[%s2 + $0x78] sm:$0xff]
        %vm283 = vcmask 269312
        %v285 = vsel %vm283, %v267, 0
        %v288 = vsel %vm283, %v268, 0
        %v291 = vsel %vm283, %v269, 0
        %v294 = vsel %vm283, %v270, 0
        %v297 = vsel %vm283, %v271, 0
        %v300 = vsel %vm283, %v272, 0
        %v303 = vsel %vm283, %v273, 0
        %v306 = vsel %vm283, %v274, 0
        %v309 = vsel %vm283, %v275, 0
        %v312 = vsel %vm283, %v276, 0
        %v315 = vsel %vm283, %v277, 0
        %v318 = vsel %vm283, %v278, 0
        %v321 = vsel %vm283, %v279, 0
        %v324 = vsel %vm283, %v280, 0
        %v327 = vsel %vm283, %v281, 0
        %v330 = vsel %vm283, %v282, 0
        %vm332 = vcmask 1040384
        %v334 = vsel %vm332, %v266, 0
        %336 = vmatpush.msra.mxu0 0.0
        %337 = vmatpush.msra.mxu0 0.0
        %338 = vmatpush.msra.mxu0 0.0
        %339 = vmatpush.msra.mxu0 0.0
        %340 = vmatpush.msra.mxu0 0.0
        %341 = vmatpush.msra.mxu0 0.0
        %342 = vmatpush.msra.mxu0 0.0
        %343 = vmatpush.msra.mxu0 0.0
        %344 = vmatpush.msra.mxu0 0.0
        %345 = vmatpush.msra.mxu0 0.0
        %346 = vmatpush.msra.mxu0 0.0
        %347 = vmatpush.msra.mxu0 %v334
        %348 = vmatpush.msra.mxu0 %v265
        %349 = vmatpush.msra.mxu0 %v264
        %350 = vmatpush.msra.mxu0 %v263
        %351 = vmatpush.msra.mxu0 %v262
        %352 = vmatmul.f32.gmra.mxu0 %v285
        %v353 = vpop.f32.mrf.mxu0
        %v354 = vadd.f32 0.0, %v353
        %355 = vmatmul.f32.gmra.mxu0 %v288
        %v356 = vpop.f32.mrf.mxu0
        %v357 = vadd.f32 0.0, %v356
        %358 = vmatmul.f32.gmra.mxu0 %v291
        %v359 = vpop.f32.mrf.mxu0
        %v360 = vadd.f32 0.0, %v359
        %361 = vmatmul.f32.gmra.mxu0 %v294
        %v362 = vpop.f32.mrf.mxu0
        %v363 = vadd.f32 0.0, %v362
        %364 = vmatmul.f32.gmra.mxu0 %v297
        %v365 = vpop.f32.mrf.mxu0
        %v366 = vadd.f32 0.0, %v365
        %367 = vmatmul.f32.gmra.mxu0 %v300
        %v368 = vpop.f32.mrf.mxu0
        %v369 = vadd.f32 0.0, %v368
        %370 = vmatmul.f32.gmra.mxu0 %v303
        %v371 = vpop.f32.mrf.mxu0
        %v372 = vadd.f32 0.0, %v371
        %373 = vmatmul.f32.gmra.mxu0 %v306
        %v374 = vpop.f32.mrf.mxu0
        %v375 = vadd.f32 0.0, %v374
        %376 = vmatmul.f32.gmra.mxu0 %v309
        %v377 = vpop.f32.mrf.mxu0
        %v378 = vadd.f32 0.0, %v377
        %379 = vmatmul.f32.gmra.mxu0 %v312
        %v380 = vpop.f32.mrf.mxu0
        %v381 = vadd.f32 0.0, %v380
        %382 = vmatmul.f32.gmra.mxu0 %v315
        %v383 = vpop.f32.mrf.mxu0
        %v384 = vadd.f32 0.0, %v383
        %385 = vmatmul.f32.gmra.mxu0 %v318
        %v386 = vpop.f32.mrf.mxu0
        %v387 = vadd.f32 0.0, %v386
        %388 = vmatmul.f32.gmra.mxu0 %v321
        %v389 = vpop.f32.mrf.mxu0
        %v390 = vadd.f32 0.0, %v389
        %391 = vmatmul.f32.gmra.mxu0 %v324
        %v392 = vpop.f32.mrf.mxu0
        %v393 = vadd.f32 0.0, %v392
        %394 = vmatmul.f32.gmra.mxu0 %v327
        %v395 = vpop.f32.mrf.mxu0
        %v396 = vadd.f32 0.0, %v395
        %397 = vmatmul.f32.gmra.mxu0 %v330
        %v398 = vpop.f32.mrf.mxu0
        %v399 = vadd.f32 0.0, %v398
        %400 = vdwg.mxu0
        %v401 = vmin.f32 %v354, %v366
        %v402 = vmin.f32 %v357, %v369
        %v403 = vmin.f32 %v360, %v372
        %v404 = vmin.f32 %v363, %v375
        %v405 = vmin.f32 %v401, %v378
        %v406 = vmin.f32 %v402, %v381
        %v407 = vmin.f32 %v403, %v384
        %v408 = vmin.f32 %v404, %v387
        %v409 = vmin.f32 %v405, %v390
        %v410 = vmin.f32 %v406, %v393
        %v411 = vmin.f32 %v407, %v396
        %v412 = vmin.f32 %v408, %v399
        %v413 = vmin.f32 %v409, %v410
        %v414 = vmin.f32 %v411, %v412
        %v415 = vmin.f32 %v413, %v414
        %v416 = vrot.slane %v415, 4
        %v417 = vmin.f32 %v415, %v416
        %v418 = vrot.slane %v417, 2
        %v419 = vmin.f32 %v417, %v418
        %v420 = vrot.slane %v419, 1
        %v421 = vmin.f32 %v419, %v420
        %vm422 = vcmp.eq.f32.partialorder %v354, %v421
        %vm423 = vcmp.eq.f32.partialorder %v357, %v421
        %vm424 = vcmp.eq.f32.partialorder %v360, %v421
        %vm425 = vcmp.eq.f32.partialorder %v363, %v421
        %vm426 = vcmp.eq.f32.partialorder %v366, %v421
        %vm427 = vcmp.eq.f32.partialorder %v369, %v421
        %vm428 = vcmp.eq.f32.partialorder %v372, %v421
        %vm429 = vcmp.eq.f32.partialorder %v375, %v421
        %vm430 = vcmp.eq.f32.partialorder %v378, %v421
        %vm431 = vcmp.eq.f32.partialorder %v381, %v421
        %vm432 = vcmp.eq.f32.partialorder %v384, %v421
        %vm433 = vcmp.eq.f32.partialorder %v387, %v421
        %vm434 = vcmp.eq.f32.partialorder %v390, %v421
        %vm435 = vcmp.eq.f32.partialorder %v393, %v421
        %vm436 = vcmp.eq.f32.partialorder %v396, %v421
        %vm437 = vcmp.eq.f32.partialorder %v399, %v421
        %v438 = vsel %vm422, 1, 0
        %v439 = vsel %vm423, 1, 0
        %v440 = vsel %vm424, 1, 0
        %v441 = vsel %vm425, 1, 0
        %v442 = vsel %vm426, 1, 0
        %v443 = vsel %vm427, 1, 0
        %v444 = vsel %vm428, 1, 0
        %v445 = vsel %vm429, 1, 0
        %v446 = vsel %vm430, 1, 0
        %v447 = vsel %vm431, 1, 0
        %v448 = vsel %vm432, 1, 0
        %v449 = vsel %vm433, 1, 0
        %v450 = vsel %vm434, 1, 0
        %v451 = vsel %vm435, 1, 0
        %v452 = vsel %vm436, 1, 0
        %v453 = vsel %vm437, 1, 0
        %v454 = vcvt.s32.f32 %v438
        %v455 = vcvt.s32.f32 %v439
        %v456 = vcvt.s32.f32 %v440
        %v457 = vcvt.s32.f32 %v441
        %v458 = vcvt.s32.f32 %v442
        %v459 = vcvt.s32.f32 %v443
        %v460 = vcvt.s32.f32 %v444
        %v461 = vcvt.s32.f32 %v445
        %v462 = vcvt.s32.f32 %v446
        %v463 = vcvt.s32.f32 %v447
        %v464 = vcvt.s32.f32 %v448
        %v465 = vcvt.s32.f32 %v449
        %v466 = vcvt.s32.f32 %v450
        %v467 = vcvt.s32.f32 %v451
        %v468 = vcvt.s32.f32 %v452
        %v469 = vcvt.s32.f32 %v453
        %v470 = vld [vmem:[%s3] sm:$0xff]
        %471 = vmatpush.msra.mxu0 %v469
        %472 = vmatpush.msra.mxu0 %v468
        %473 = vmatpush.msra.mxu0 %v467
        %474 = vmatpush.msra.mxu0 %v466
        %475 = vmatpush.msra.mxu0 %v465
        %476 = vmatpush.msra.mxu0 %v464
        %477 = vmatpush.msra.mxu0 %v463
        %478 = vmatpush.msra.mxu0 %v462
        %479 = vmatpush.msra.mxu0 %v461
        %480 = vmatpush.msra.mxu0 %v460
        %481 = vmatpush.msra.mxu0 %v459
        %482 = vmatpush.msra.mxu0 %v458
        %483 = vmatpush.msra.mxu0 %v457
        %484 = vmatpush.msra.mxu0 %v456
        %485 = vmatpush.msra.mxu0 %v455
        %486 = vmatpush.msra.mxu0 %v454
        %487 = vmatmul.f32.gmra.mxu0 %v470
        %v488 = vpop.f32.mrf.mxu0
        %v489 = vadd.f32 0.0, %v488
        %490 = vdwg.mxu0
        %491 = vst [vmem:[%s235] sm:$0xff] %v489
        %s492 = sand.u32 %s138, 1
        %s493 = scalar_lea.sflag [#allocation3], %s492
        %s494 = sand.u32 %s138, 1
        %s495 = smul.addr %s494, 8
        %s496 = scalar_lea.vmem [#allocation2], %s495
        // Predicated region
        $region37: #{tpu_custom_call.1} parent=35 // pred_check
          %p497 = pneg %p148
        $region38: #{tpu_custom_call.1} parent=35 // pred_check_branch
          %499 = sbr.rel (%p497) target = $region40
        $region39: #{tpu_custom_call.1} parent=35 // pred_region
          %501 = vsyncadd %s493, 0
          %s502 = sadd.s32 %s23, %s22
          %s503 = smul.addr %s502, 8
          %s504 = scalar_lea.hbm %s4, %s503
          %s506 = sshll.u32 %s496, 4
          %s507 = int_to_ptr.vmem [resolvable:$true] %s506
          %s508 = sshll.u32 %s504, 4
          %s509 = int_to_ptr.hbm [resolvable:$true] %s508
          %511 = dma.vmem_to_hbm [thread:$0]  %s507, 128, %s509, %s493
        $region40: #{tpu_custom_call.1} parent=35 // pred_fallthru
          _
      $region36: #{tpu_custom_call.1} parent=5 // pred_fallthru
        _
      %p512 = scmp.le.s32.totalorder 2, %s13
      // Predicated region
      $region41: #{tpu_custom_call.1} parent=5 // pred_check
        %p513 = pneg %p512
      $region42: #{tpu_custom_call.1} parent=5 // pred_check_branch
        %515 = sbr.rel (%p513) target = $region44
      $region43: #{tpu_custom_call.1} parent=5 // pred_region
        %s516 = ssub.s32 %s13, 2
        // Predicated region
        $region45: #{tpu_custom_call.1} parent=43 // pred_check
          %p517 = pneg %p154
        $region46: #{tpu_custom_call.1} parent=43 // pred_check_branch
          %519 = sbr.rel (%p517) target = $region48
        $region47: #{tpu_custom_call.1} parent=43 // pred_region
          %s520 = sand.u32 %s139, 1
          %s521 = scalar_lea.sflag [#allocation3], %s520
          %s522 = sand.u32 %s139, 1
          %s523 = smul.addr %s522, 8
          %s524 = scalar_lea.vmem [#allocation2], %s523
          %526 = dma.done %s521, 128
        $region48: #{tpu_custom_call.1} parent=43 // pred_fallthru
          _
      $region44: #{tpu_custom_call.1} parent=5 // pred_fallthru
        _
    $region6: #{tpu_custom_call.1} parent=1 // loop_footer
      %s17 = sadd.s32 1, %s13
    $region7: #{tpu_custom_call.1} parent=1 // loop_footer_branch
      %12 = sbr.rel target = $region3
    $region8: #{tpu_custom_call.1} parent=1 // loop_exit
      _
    %527 = vsyncpa [#allocation3], 1
    %s528 = scalar_lea.sflag [#allocation3], 1
    %529 = vsyncpa %s528, 1

</llo_original>
